<compile_context>
chip_gen: v6e
topology: v6e:2x2x1
jax: 0.10.0
libtpu: 0.0.40
codegen_flags: <defaults>
</compile_context>

<pallas_src>
import functools

import jax
import jax.numpy as jnp
from jax import lax
from jax.experimental import pallas as pl
from jax.experimental.pallas import tpu as pltpu

ALPHA = 0.25   # deterministic "parameters" from __init__(alpha=0.25, gamma=2)
GAMMA = 2

_LANES = 128
_CHUNK_ROWS = 128        # rows per inner-loop step: (128,128) f32 = 16 vregs/value
_MAX_BLOCK_ROWS = 8192   # (8192,128) f32 = 4 MiB / input / block
_SMALL_ROWS = 1024       # <= this many rows -> single-program kernel


def _cdiv(a, b):
    return -(-a // b)


def _round_up(a, b):
    return _cdiv(a, b) * b


def _focal_elementwise(x, t, alpha, gamma):
    """Per-element focal loss; x, t are float32 arrays of identical shape."""
    e = jnp.exp(-jnp.abs(x))                       # single exp / element (EUP)
    one_plus_e = 1.0 + e
    # Numerically-stable BCE-with-logits (== F.binary_cross_entropy_with_logits).
    bce = jnp.maximum(x, 0.0) - x * t + jnp.log(one_plus_e)
    # pt = exp(-bce): for binary t this is sigmoid(x) if t==1 else 1-sigmoid(x).
    # Both branches share the 1/(1+e) denominator; one select picks the
    # numerator (1 or e) -> no second exp, one divide.
    num = jnp.where((x >= 0.0) == (t > 0.5), 1.0, e)
    pt = num / one_plus_e
    # at = [alpha, 1-alpha][t]  ==  alpha + t*(1 - 2*alpha)   (single FMA).
    at = alpha + t * (1.0 - 2.0 * alpha)
    om = 1.0 - pt
    focal = om * om if gamma == 2 else om ** gamma  # gamma is static
    return at * focal * bce


def _small_kernel(x_ref, t_ref, out_ref, *, alpha, gamma, n_valid, need_mask):
    """One-shot kernel for small problems (rows <= _SMALL_ROWS)."""
    x = x_ref[...].astype(jnp.float32)
    t = t_ref[...].astype(jnp.float32)
    f = _focal_elementwise(x, t, alpha, gamma)
    if need_mask:  # static: emitted only when n is not a multiple of 128
        rid = lax.broadcasted_iota(jnp.int32, f.shape, 0)
        lid = lax.broadcasted_iota(jnp.int32, f.shape, 1)
        f = jnp.where(rid * _LANES + lid < n_valid, f, 0.0)
    out_ref[...] = jnp.sum(f, axis=0, keepdims=True)   # per-lane partial sums


def _tiled_kernel(x_ref, t_ref, out_ref, *, alpha, gamma, n_valid, block_rows,
                  steps):
    """Streaming kernel: grid (n_splits, steps), chunked accumulation."""
    c = pl.program_id(0)
    i = pl.program_id(1)

    @pl.when(i == 0)
    def _():
        out_ref[...] = jnp.zeros_like(out_ref)

    # Logical element index of this block's start (clamped duplicate blocks
    # from an over-covering grid get a base >= n_valid and contribute 0).
    # int32 math: fine for n < ~2e9.
    block_base = (c * steps + i) * (block_rows * _LANES)
    n_chunks = block_rows // _CHUNK_ROWS
    chunk_elems = _CHUNK_ROWS * _LANES

    def body(k, carry):
        r0 = pl.multiple_of(k * _CHUNK_ROWS, _CHUNK_ROWS)
        x = x_ref[pl.ds(r0, _CHUNK_ROWS), :].astype(jnp.float32)
        t = t_ref[pl.ds(r0, _CHUNK_ROWS), :].astype(jnp.float32)
        f = _focal_elementwise(x, t, alpha, gamma)
        cbase = block_base + r0 * _LANES
        full = cbase + chunk_elems <= n_valid

        @pl.when(full)
        def _():
            # vreg-wise tree add into the resident (8,128) output block (VPU).
            out_ref[...] += jnp.sum(
                f.reshape(_CHUNK_ROWS // 8, 8, _LANES), axis=0)

        @pl.when(jnp.logical_not(full))
        def _():
            # Tail chunk (and any fully-out-of-range duplicate): mask on the
            # true element count.  jnp.where is a select, so garbage (even
            # NaN/Inf) in the undefined out-of-bounds rows cannot leak in.
            rid = lax.broadcasted_iota(jnp.int32, (_CHUNK_ROWS, _LANES), 0)
            lid = lax.broadcasted_iota(jnp.int32, (_CHUNK_ROWS, _LANES), 1)
            gidx = cbase + rid * _LANES + lid
            fm = jnp.where(gidx < n_valid, f, 0.0)
            out_ref[...] += jnp.sum(
                fm.reshape(_CHUNK_ROWS // 8, 8, _LANES), axis=0)

        return carry

    lax.fori_loop(0, n_chunks, body, 0)


def _canon(a):
    """Keep bandwidth-friendly dtypes the TPU tiling handles; cast the rest."""
    if a.dtype == jnp.float32 or a.dtype == jnp.bfloat16:
        return a
    return a.astype(jnp.float32)


def weighted_focal_loss(inputs, targets, alpha=ALPHA, gamma=GAMMA):
    """Mean binary focal loss; inputs/targets may be any (matching) shape."""
    x = _canon(jnp.asarray(inputs).reshape(-1))
    t = _canon(jnp.asarray(targets).reshape(-1))
    n = x.shape[0]

    # Minimal lane-alignment pad: only when n is not a multiple of 128 (needed
    # for the (rows,128) reshape). The kernel masks on the true n, so the pad
    # value is irrelevant.  No grid-coverage padding is ever materialized.
    rem = (-n) % _LANES
    if rem:
        x = jnp.pad(x, (0, rem))
        t = jnp.pad(t, (0, rem))
    rows = (n + rem) // _LANES
    x2 = x.reshape(rows, _LANES)
    t2 = t.reshape(rows, _LANES)

    cost = pl.CostEstimate(
        flops=22 * n,
        transcendentals=3 * n,
        bytes_accessed=x2.size * x2.dtype.itemsize + t2.size * t2.dtype.itemsize,
    )

    if rows <= _SMALL_ROWS:
        # Small problem: one block covering everything (block == full dims, so
        # no (8,128) divisibility constraint), grid (1,).
        kernel = functools.partial(
            _small_kernel, alpha=float(alpha), gamma=int(gamma),
            n_valid=n, need_mask=bool(rem))
        out = pl.pallas_call(
            kernel,
            out_shape=jax.ShapeDtypeStruct((1, _LANES), jnp.float32),
            grid_spec=pltpu.PrefetchScalarGridSpec(
                num_scalar_prefetch=0,
                grid=(1,),
                in_specs=[pl.BlockSpec((rows, _LANES), lambda i: (0, 0)),
                          pl.BlockSpec((rows, _LANES), lambda i: (0, 0))],
                out_specs=pl.BlockSpec((1, _LANES), lambda i: (0, 0)),
            ),
            compiler_params=pltpu.CompilerParams(
                dimension_semantics=("arbitrary",)),
            cost_estimate=cost,
        )(x2, t2)
        return jnp.sum(out) / jnp.float32(n)

    # ---- streaming (tiled) path ----------------------------------------
    # Two "parallel" splits (v7x megacore shards them; single-TC chips just run
    # them back-to-back) once each split gets >= _SMALL_ROWS rows of work.
    n_splits = 2 if rows >= 2 * _SMALL_ROWS else 1
    steps = max(_cdiv(rows, n_splits * _MAX_BLOCK_ROWS),
                2 if n_splits == 1 else 1)           # keep block <= array rows
    # Balanced block size (multiple of the 128-row chunk): tail waste < 128 rows.
    block_rows = min(_MAX_BLOCK_ROWS,
                     _round_up(_cdiv(rows, n_splits * steps), _CHUNK_ROWS))
    n_blocks = _cdiv(rows, block_rows)
    last_block = n_blocks - 1

    def in_map(c, i):
        # Clamp so a (rare) over-covering trailing step re-reads the last valid
        # block; its contribution is masked to zero inside the kernel.
        return (jnp.minimum(c * steps + i, last_block), 0)

    kernel = functools.partial(
        _tiled_kernel, alpha=float(alpha), gamma=int(gamma),
        n_valid=n, block_rows=block_rows, steps=steps)

    partials = pl.pallas_call(
        kernel,
        out_shape=jax.ShapeDtypeStruct((n_splits * 8, _LANES), jnp.float32),
        grid_spec=pltpu.PrefetchScalarGridSpec(
            num_scalar_prefetch=0,
            grid=(n_splits, steps),
            in_specs=[pl.BlockSpec((block_rows, _LANES), in_map),
                      pl.BlockSpec((block_rows, _LANES), in_map)],
            out_specs=pl.BlockSpec((8, _LANES), lambda c, i: (c, 0)),
        ),
        compiler_params=pltpu.CompilerParams(
            dimension_semantics=("parallel", "arbitrary"),
            vmem_limit_bytes=32 * 1024 * 1024,
        ),
        cost_estimate=cost,
    )(x2, t2)

    # Per-split / per-lane partial sums -> mean over the *true* element count.
    return jnp.sum(partials) / jnp.float32(n)


def _reference(inputs, targets, alpha=ALPHA, gamma=GAMMA):
    x = jnp.asarray(inputs, jnp.float32).reshape(-1)
    t = jnp.asarray(targets, jnp.float32).reshape(-1)
    bce = jnp.maximum(x, 0.0) - x * t + jnp.log1p(jnp.exp(-jnp.abs(x)))
    at = jnp.where(t.astype(jnp.int32) == 0, alpha, 1.0 - alpha)
    pt = jnp.exp(-bce)
    return jnp.mean(at * (1.0 - pt) ** gamma * bce)


if __name__ == "__main__":
    key = jax.random.PRNGKey(0)
    k1, k2, k3, k4 = jax.random.split(key, 4)

    # Small shape implied by the module: batch=2, channels=4, 16x16 logit map.
    logits = jax.random.normal(k1, (2, 4, 16, 16), dtype=jnp.float32)
    targets = jax.random.bernoulli(k2, 0.3, (2, 4, 16, 16)).astype(jnp.float32)

    loss = weighted_focal_loss(logits, targets)
    jax.block_until_ready(loss)
    ref = _reference(logits, targets)
    assert jnp.allclose(loss, ref, rtol=1e-5, atol=1e-6), (loss, ref)

    # Larger flat problem: exercises the streaming path, the 2-way split,
    # partial blocks and the in-kernel tail mask (1e6 is not a multiple of 128).
    big_logits = jax.random.normal(k3, (1_000_000,), dtype=jnp.float32)
    big_targets = jax.random.bernoulli(k4, 0.3, (1_000_000,)).astype(jnp.float32)
    big_loss = weighted_focal_loss(big_logits, big_targets)
    jax.block_until_ready(big_loss)
    big_ref = _reference(big_logits, big_targets)
    assert jnp.allclose(big_loss, big_ref, rtol=1e-4, atol=1e-6), (big_loss, big_ref)

    print("KERNEL_OK")
</pallas_src>

<mosaic_0001>
module attributes {stable_mosaic.version = 11 : i64} {
  func.func @_small_kernel(%arg0: i32, %arg1: memref<16x128xf32, #tpu.memory_space<vmem>>, %arg2: memref<16x128xf32, #tpu.memory_space<vmem>>, %arg3: memref<1x128xf32, #tpu.memory_space<vmem>>) attributes {dimension_semantics = [#tpu.dimension_semantics<arbitrary>], iteration_bounds = array<i64: 1>, scalar_prefetch = 0 : i64, scratch_operands = 0 : i64, tpu.core_type = #tpu.core_type<tc>, window_params = [{pipeline_mode = #tpu.pipeline_mode<synchronous>, transform_indices = @transform_0, window_bounds = array<i64: 16, 128>}, {pipeline_mode = #tpu.pipeline_mode<synchronous>, transform_indices = @transform_1, window_bounds = array<i64: 16, 128>}, {pipeline_mode = #tpu.pipeline_mode<synchronous>, transform_indices = @transform_2, window_bounds = array<i64: 1, 128>}]} {
    %c0 = arith.constant 0 : index
    %c0_0 = arith.constant 0 : index
    %0 = vector.load %arg1[%c0, %c0_0] : memref<16x128xf32, #tpu.memory_space<vmem>>, vector<16x128xf32>
    %c0_1 = arith.constant 0 : index
    %c0_2 = arith.constant 0 : index
    %1 = vector.load %arg2[%c0_1, %c0_2] : memref<16x128xf32, #tpu.memory_space<vmem>>, vector<16x128xf32>
    %2 = math.absf %0 : vector<16x128xf32>
    %cst = arith.constant 0.000000e+00 : f32
    %3 = vector.broadcast %cst : f32 to vector<16x128xf32>
    %4 = arith.subf %3, %2 : vector<16x128xf32>
    %5 = math.exp %4 : vector<16x128xf32>
    %cst_3 = arith.constant 1.000000e+00 : f32
    %6 = vector.broadcast %cst_3 : f32 to vector<16x128xf32>
    %7 = arith.addf %6, %5 : vector<16x128xf32>
    %cst_4 = arith.constant 0.000000e+00 : f32
    %8 = vector.broadcast %cst_4 : f32 to vector<16x128xf32>
    %9 = arith.maximumf %0, %8 : vector<16x128xf32>
    %10 = arith.mulf %0, %1 : vector<16x128xf32>
    %11 = arith.subf %9, %10 : vector<16x128xf32>
    %12 = math.log %7 : vector<16x128xf32>
    %13 = arith.addf %11, %12 : vector<16x128xf32>
    %cst_5 = arith.constant 0.000000e+00 : f32
    %14 = vector.broadcast %cst_5 : f32 to vector<16x128xf32>
    %15 = arith.cmpf oge, %0, %14 : vector<16x128xf32>
    %cst_6 = arith.constant 5.000000e-01 : f32
    %16 = vector.broadcast %cst_6 : f32 to vector<16x128xf32>
    %17 = arith.cmpf ogt, %1, %16 : vector<16x128xf32>
    %18 = arith.xori %15, %17 : vector<16x128xi1>
    %cst_7 = arith.constant dense<true> : vector<16x128xi1>
    %19 = arith.xori %18, %cst_7 : vector<16x128xi1>
    %cst_8 = arith.constant 1.000000e+00 : f32
    %20 = vector.broadcast %cst_8 : f32 to vector<16x128xf32>
    %21 = arith.select %19, %20, %5 : vector<16x128xi1>, vector<16x128xf32>
    %22 = arith.divf %21, %7 : vector<16x128xf32>
    %cst_9 = arith.constant 5.000000e-01 : f32
    %23 = vector.broadcast %cst_9 : f32 to vector<16x128xf32>
    %24 = arith.mulf %1, %23 : vector<16x128xf32>
    %cst_10 = arith.constant 2.500000e-01 : f32
    %25 = vector.broadcast %cst_10 : f32 to vector<16x128xf32>
    %26 = arith.addf %25, %24 : vector<16x128xf32>
    %cst_11 = arith.constant 1.000000e+00 : f32
    %27 = vector.broadcast %cst_11 : f32 to vector<16x128xf32>
    %28 = arith.subf %27, %22 : vector<16x128xf32>
    %29 = arith.mulf %28, %28 : vector<16x128xf32>
    %30 = arith.mulf %26, %29 : vector<16x128xf32>
    %31 = arith.mulf %30, %13 : vector<16x128xf32>
    %cst_12 = arith.constant dense<0.000000e+00> : vector<128xf32>
    %32 = vector.multi_reduction <add>, %31, %cst_12 [0] : vector<16x128xf32> to vector<128xf32>
    %33 = vector.shape_cast %32 : vector<128xf32> to vector<1x128xf32>
    %c0_13 = arith.constant 0 : index
    %c0_14 = arith.constant 0 : index
    %34 = vector.load %arg3[%c0_13, %c0_14] : memref<1x128xf32, #tpu.memory_space<vmem>>, vector<1x128xf32>
    tpu.vector_store %arg3[%c0_13, %c0_14], %33 {strides = array<i32>} : memref<1x128xf32, #tpu.memory_space<vmem>>, vector<1x128xf32>,
    return
  }
  func.func @transform_0(%arg0: i32) -> (i32, i32) {
    %c0_i32 = arith.constant 0 : i32
    %c0_i32_0 = arith.constant 0 : i32
    %c0_i32_1 = arith.constant 0 : i32
    return %c0_i32, %c0_i32_0 : i32, i32
  }
  func.func @transform_1(%arg0: i32) -> (i32, i32) {
    %c0_i32 = arith.constant 0 : i32
    %c0_i32_0 = arith.constant 0 : i32
    %c0_i32_1 = arith.constant 0 : i32
    return %c0_i32, %c0_i32_0 : i32, i32
  }
  func.func @transform_2(%arg0: i32) -> (i32, i32) {
    %c0_i32 = arith.constant 0 : i32
    %c0_i32_0 = arith.constant 0 : i32
    %c0_i32_1 = arith.constant 0 : i32
    return %c0_i32, %c0_i32_0 : i32, i32
  }
}

</mosaic_0001>

<llo_original>
// kernel: tpu_custom_call.1
$region0: #{tpu_custom_call.1}
  #allocation0 [shape = 'u32[]', space=smem, size = 0x4, offset = 0x4, fixed_abs, tag = 'smem constant byte address 0x4 - core index']
  #allocation1 [shape = 'u32[144,128]{1,0:T(1,128)}', space=vmem, size = 0x12000, scoped, tag = 'internal scratch']
  %s0 = inlined_call_operand.hbm [shape: f32[16,128], index: 0, kind: input, shape index: {}]
  %s1 = inlined_call_operand.hbm [shape: f32[16,128], index: 1, kind: input, shape index: {}]
  %s2 = inlined_call_operand.hbm [shape: f32[1,128], index: 2, kind: output, shape index: {}]
  %s3 = sld [smem:[#allocation0]]
  $region26: #{tpu_custom_call.1} parent=0
    _
  %s5 = ssub.s32 1, %s3
  %s6 = scalar_select 0, %s5, %s3
  $region1: #{tpu_custom_call.1} parent=0
    #allocation2 [shape = 'u8[8192]{0}', space=vmem, size = 0x2000, scoped, tag = 'input window, operand 0, single buffered']
    #allocation3 [shape = 's32[1]{0}', space=sflag, size = 0x4, scoped, tag = 'scoped memory for tpu_custom_call.1']
    #allocation4 [shape = 's32[1]{0}', space=sflag, size = 0x4, scoped, tag = 'scoped memory for tpu_custom_call.1']
    #allocation5 [shape = 'u8[8192]{0}', space=vmem, size = 0x2000, scoped, tag = 'input window, operand 1, single buffered']
    #allocation6 [shape = 's32[1]{0}', space=sflag, size = 0x4, scoped, tag = 'scoped memory for tpu_custom_call.1']
    #allocation7 [shape = 'u8[512]{0}', space=vmem, size = 0x400, scoped, tag = 'output window, operand 0, single buffered']
    %7 = vsyncpa [#allocation3], 0
    %8 = vsyncpa [#allocation6], 0
    %9 = vsyncpa [#allocation4], 0
    // Predicated region
    $region2: #{tpu_custom_call.1} parent=1 // pred_check
      _
    $region3: #{tpu_custom_call.1} parent=1 // pred_check_branch
      %11 = sbr.rel (0) target = $region5
    $region4: #{tpu_custom_call.1} parent=1 // pred_region
      %s13 = ssub.s32 256, 256
      %14 = vsyncadd [#allocation3], %s13
      %s15 = sshll.u32 [#allocation2], 4
      %s16 = int_to_ptr.vmem [resolvable:$true] %s15
      %21 = dma.hbm_to_vmem [thread:$0]  %s0, 256, %s16, [#allocation3], 128, 128, 8
    $region5: #{tpu_custom_call.1} parent=1 // pred_fallthru
      _
    // Predicated region
    $region6: #{tpu_custom_call.1} parent=1 // pred_check
      _
    $region7: #{tpu_custom_call.1} parent=1 // pred_check_branch
      %23 = sbr.rel (0) target = $region9
    $region8: #{tpu_custom_call.1} parent=1 // pred_region
      %s25 = ssub.s32 256, 256
      %26 = vsyncadd [#allocation6], %s25
      %s27 = sshll.u32 [#allocation5], 4
      %s28 = int_to_ptr.vmem [resolvable:$true] %s27
      %33 = dma.hbm_to_vmem [thread:$0]  %s1, 256, %s28, [#allocation6], 128, 128, 8
    $region9: #{tpu_custom_call.1} parent=1 // pred_fallthru
      _
    // Predicated region
    $region10: #{tpu_custom_call.1} parent=1 // pred_check
      _
    $region11: #{tpu_custom_call.1} parent=1 // pred_check_branch
      %35 = sbr.rel (0) target = $region13
    $region12: #{tpu_custom_call.1} parent=1 // pred_region
      %36 = dma.done [#allocation3], 256
    $region13: #{tpu_custom_call.1} parent=1 // pred_fallthru
      _
    // Predicated region
    $region14: #{tpu_custom_call.1} parent=1 // pred_check
      _
    $region15: #{tpu_custom_call.1} parent=1 // pred_check_branch
      %38 = sbr.rel (0) target = $region17
    $region16: #{tpu_custom_call.1} parent=1 // pred_region
      %39 = dma.done [#allocation6], 256
    $region17: #{tpu_custom_call.1} parent=1 // pred_fallthru
      _
    %v40 = vld [vmem:[#allocation2] sm:$0xff]
    %v41 = vld [vmem:[#allocation2 + $0x8] sm:$0xff]
    %v42 = vld [vmem:[#allocation5] sm:$0xff]
    %v43 = vld [vmem:[#allocation5 + $0x8] sm:$0xff]
    %v44 = vand.u32 2147483647, %v40
    %v45 = vand.u32 2147483647, %v41
    %v46 = vsub.f32 0.0, %v44
    %v47 = vsub.f32 0.0, %v45
    %v48 = vmul.f32 %v46, 1.442695
    %v49 = vpow.pop %v48
    %v50 = vmul.f32 %v47, 1.442695
    %v51 = vpow.pop %v50
    %v52 = vadd.f32 %v49, 1.0
    %v53 = vadd.f32 %v51, 1.0
    %v54 = vmax.f32 %v40, 0.0
    %v55 = vmax.f32 %v41, 0.0
    %v56 = vmul.f32 %v40, %v42
    %v57 = vmul.f32 %v41, %v43
    %v58 = vsub.f32 %v54, %v56
    %v59 = vsub.f32 %v55, %v57
    %v60 = vlog2.pop %v52
    %v61 = vmul.f32 %v60, 0.6931472
    %v62 = vlog2.pop %v53
    %v63 = vmul.f32 %v62, 0.6931472
    %v64 = vadd.f32 %v58, %v61
    %v65 = vadd.f32 %v59, %v63
    %vm66 = vcmp.ge.f32.partialorder %v40, 0.0
    %vm67 = vcmp.ge.f32.partialorder %v41, 0.0
    %vm68 = vcmp.gt.f32.partialorder %v42, 0.5
    %vm69 = vcmp.gt.f32.partialorder %v43, 0.5
    %vm70 = vmxor %vm66, %vm68
    %vm71 = vmxor %vm67, %vm69
    %vm72 = vmxor %vm70, 1
    %vm73 = vmxor %vm71, 1
    %v74 = vsel %vm72, 1.0, %v49
    %v75 = vsel %vm73, 1.0, %v51
    %v76 = vrcp.pop %v52
    %v77 = vmul.f32 %v74, %v76
    %v78 = vrcp.pop %v53
    %v79 = vmul.f32 %v75, %v78
    %v80 = vmul.f32 %v42, 0.5
    %v81 = vmul.f32 %v43, 0.5
    %v82 = vadd.f32 %v80, 0.25
    %v83 = vadd.f32 %v81, 0.25
    %v84 = vsub.f32 1.0, %v77
    %v85 = vsub.f32 1.0, %v79
    %v86 = vmul.f32 %v84, %v84
    %v87 = vmul.f32 %v85, %v85
    %v88 = vmul.f32 %v82, %v86
    %v89 = vmul.f32 %v83, %v87
    %v90 = vmul.f32 %v88, %v64
    %v91 = vmul.f32 %v89, %v65
    %v92 = vadd.f32 %v90, %v91
    %v93 = vrot.slane %v92, 4
    %v94 = vadd.f32 %v92, %v93
    %v95 = vrot.slane %v94, 2
    %v96 = vadd.f32 %v94, %v95
    %v97 = vrot.slane %v96, 1
    %v98 = vadd.f32 %v96, %v97
    %99 = vst [vmem:[#allocation7] sm:$0x1] %v98
    // Predicated region
    $region18: #{tpu_custom_call.1} parent=1 // pred_check
      _
    $region19: #{tpu_custom_call.1} parent=1 // pred_check_branch
      %101 = sbr.rel (0) target = $region21
    $region20: #{tpu_custom_call.1} parent=1 // pred_region
      %s103 = ssub.s32 16, 16
      %104 = vsyncadd [#allocation4], %s103
      %s106 = sshll.u32 [#allocation7], 4
      %s107 = int_to_ptr.vmem [resolvable:$true] %s106
      %109 = dma.vmem_to_hbm [thread:$0]  %s107, 16, %s2, [#allocation4]
    $region21: #{tpu_custom_call.1} parent=1 // pred_fallthru
      _
    // Predicated region
    $region22: #{tpu_custom_call.1} parent=1 // pred_check
      _
    $region23: #{tpu_custom_call.1} parent=1 // pred_check_branch
      %111 = sbr.rel (0) target = $region25
    $region24: #{tpu_custom_call.1} parent=1 // pred_region
      %112 = dma.done [#allocation4], 16
    $region25: #{tpu_custom_call.1} parent=1 // pred_fallthru
      _
    %113 = vsyncpa [#allocation3], 1
    %114 = vsyncpa [#allocation6], 1
    %115 = vsyncpa [#allocation4], 1

</llo_original>
